<compile_context>
chip_gen: v5e
topology: v5e:2x2
jax: 0.10.0
libtpu: 0.0.40
codegen_flags: <defaults>
</compile_context>

<pallas_src>
import functools

import numpy as np
import jax
import jax.numpy as jnp
from jax.experimental import pallas as pl
from jax.experimental.pallas import tpu as pltpu

NEG_SLOPE = 0.2


def _round_up(v, m):
    return (v + m - 1) // m * m


# ----------------------------------------------------------------------------
# One-time probe: confirm pltpu.roll's shift convention (defensive; cached).
# ----------------------------------------------------------------------------
@functools.lru_cache(maxsize=None)
def _pltpu_roll_sign():
    """Returns +1 if pltpu.roll follows jnp.roll's shift convention, else -1."""
    def k(x_ref, o_ref):
        o_ref[...] = pltpu.roll(x_ref[...], 1, axis=1)

    x = jnp.broadcast_to(jnp.arange(128, dtype=jnp.int32)[None, :], (8, 128))
    out = pl.pallas_call(k, out_shape=jax.ShapeDtypeStruct((8, 128), jnp.int32))(x)
    return 1 if int(out[0, 1]) == 0 else -1


# ----------------------------------------------------------------------------
# Pallas kernel: 3x3 conv (stride 1, pad 1 fused) + bias + LeakyReLU(0.2)
# ----------------------------------------------------------------------------
def _conv3x3_lrelu_kernel(x_ref, halo_ref, w_ref, b_ref, o_ref, slab_ref,
                          *, W, roll_sign):
    # x_ref    : (1, Cin, TH*W)   main row-tile, NCHW-flat, compute dtype
    # halo_ref : (1, 6, Cin, W)   rows above/below the tile, pre dx-shifted and
    #                             border-zeroed: [0:3]=row above, [3:6]=row below
    # w_ref    : (Cout, 9*Cin)    3x3 taps folded into the contraction dim
    # b_ref    : (Cout, 1)        f32
    # o_ref    : (1, Cout, TH*W)  lane-dense output tile (NCHW-flat)
    # slab_ref : (9*Cin, TH*W)    VMEM im2col scratch, compute dtype
    THW = x_ref.shape[2]
    Cin = x_ref.shape[1]
    x = x_ref[0]                                            # (Cin, THW)
    zero = jnp.zeros((), x.dtype)

    # in-kernel column index of every lane (no mask input from HBM)
    col = jax.lax.broadcasted_iota(jnp.int32, (1, THW), 1)
    col = (col & (W - 1)) if (W & (W - 1)) == 0 else (col % W)
    not_left = col != 0                                     # kills dx==0 wrap at c==0
    not_right = col != (W - 1)                              # kills dx==2 wrap at c==W-1

    for dy in range(3):
        for dx in range(3):
            t = dy * 3 + dx
            shift = (((1 - dy) * W + (1 - dx)) * roll_sign) % THW
            tap = x if shift == 0 else pltpu.roll(x, shift, axis=1)
            if dx == 0:
                tap = jnp.where(not_left, tap, zero)        # fused left column pad
            elif dx == 2:
                tap = jnp.where(not_right, tap, zero)       # fused right column pad
            slab_ref[t * Cin:(t + 1) * Cin, :] = tap
            # lanes that wrapped across the tile edge get the true halo row
            if dy == 0:
                slab_ref[t * Cin:(t + 1) * Cin, :W] = halo_ref[0, dx]
            elif dy == 2:
                slab_ref[t * Cin:(t + 1) * Cin, THW - W:] = halo_ref[0, 3 + dx]

    # single MXU matmul per tile: (Cout, 9*Cin) @ (9*Cin, THW) -> f32
    y = jnp.dot(w_ref[...], slab_ref[...], preferred_element_type=jnp.float32)
    y = y + b_ref[...]                                      # bias (f32)
    y = jnp.where(y > 0, y, NEG_SLOPE * y)                  # LeakyReLU(0.2), f32
    o_ref[0] = y.astype(o_ref.dtype)


# ----------------------------------------------------------------------------
# VMEM budget / row-tile chooser
# ----------------------------------------------------------------------------
def _vmem_caps():
    try:
        cap = int(pltpu.get_tpu_info().vmem_capacity_bytes)
    except Exception:
        cap = 64 << 20                      # conservative: v7x per-core VMEM
    tile_budget = min(cap // 2, 48 << 20)
    vmem_limit = min((cap * 3) // 4, 96 << 20)
    return tile_budget, vmem_limit


def _choose_row_tile(H, W, Cin, Cout, act_bytes, out_bytes, n_batch,
                     budget_bytes, min_grid=4):
    """Largest TH dividing H with lane-aligned tiles that fits the VMEM budget,
    shrunk only as far as needed to keep >= min_grid grid steps (megacore)."""
    cands = [th for th in range(H, 0, -1)
             if H % th == 0 and ((th * W) % 128 == 0 or th == H)]
    # TODO(synk): if H*W is not a multiple of 128 the lone th==H tile is
    # lane-padded (masked stores); pad W to a 128 multiple upstream for such sizes.

    def vmem_need(th):
        thw = th * W
        return (2 * Cin * thw * act_bytes        # main input tile, double-buffered
                + 9 * Cin * thw * act_bytes      # im2col slab scratch (single copy)
                + Cout * thw * 4                 # f32 matmul result
                + 2 * Cout * thw * out_bytes)    # output tile, double-buffered

    fitting = [th for th in cands if vmem_need(th) <= budget_bytes] or [cands[-1]]
    for th in fitting:                           # descending: largest first
        if n_batch * (H // th) >= min_grid:
            return th
    return fitting[0]


# ----------------------------------------------------------------------------
# Wrapper: PyTorch layouts in / out (NCHW activations, OIHW weights)
# ----------------------------------------------------------------------------
def conv3x3_lrelu(x_nchw, weight, bias, *, compute_dtype=jnp.bfloat16,
                  row_tile=None):
    """3x3 conv (stride 1, pad 1) + bias + LeakyReLU(0.2). NCHW in / NCHW out.

    compute_dtype: dtype of the MXU operands and of the activation array the
      kernel streams from HBM (bf16 default; pass jnp.float32 for exact parity
      with the f32 PyTorch reference). Accumulation / bias / LeakyReLU are f32;
      the output keeps x's dtype.
    """
    N, Cin, H, W = x_nchw.shape
    Cout = weight.shape[0]
    out_dtype = x_nchw.dtype
    cdt = jnp.dtype(compute_dtype if compute_dtype is not None else x_nchw.dtype)

    # pad channel dims to sublane multiples (keeps every slab store aligned;
    # a no-op for the usual multiple-of-8 channel counts)
    Cin_p = _round_up(Cin, 8)
    Cout_p = _round_up(Cout, 8)

    budget, vmem_limit = _vmem_caps()
    if row_tile is None:
        TH = _choose_row_tile(H, W, Cin_p, Cout_p, cdt.itemsize,
                              jnp.dtype(out_dtype).itemsize, N, budget)
    else:
        assert H % row_tile == 0 and ((row_tile * W) % 128 == 0 or row_tile == H)
        TH = row_tile
    nh = H // TH
    THW = TH * W

    xc = x_nchw.astype(cdt)
    if Cin_p != Cin:
        xc = jnp.pad(xc, ((0, 0), (0, Cin_p - Cin), (0, 0), (0, 0)))
    x_flat = xc.reshape(N, Cin_p, H * W)                    # free (row-major)

    # Halo rows (row above / below each tile), zeroed at the image border and
    # pre-shifted for dx in {0,1,2}:  (N*nh, 6, Cin_p, W),  6 = {top,bot} x {dx}.
    x_hpad = jnp.pad(xc, ((0, 0), (0, 0), (1, 1), (0, 0)))  # (N, Cin_p, H+2, W)
    top_idx = np.arange(nh) * TH                            # padded row == h*TH-1
    bot_idx = top_idx + TH + 1                              # padded row == (h+1)*TH
    rows = jnp.stack([x_hpad[:, :, top_idx, :],
                      x_hpad[:, :, bot_idx, :]], axis=3)    # (N, Cin_p, nh, 2, W)
    zcol = jnp.zeros_like(rows[..., :1])
    left = jnp.concatenate([zcol, rows[..., :-1]], axis=-1)   # col c -> row[c-1]
    right = jnp.concatenate([rows[..., 1:], zcol], axis=-1)   # col c -> row[c+1]
    halo = jnp.stack([left, rows, right], axis=4)             # (N,Cin_p,nh,2,3,W)
    halo = jnp.transpose(halo, (0, 2, 3, 4, 1, 5)).reshape(N * nh, 6, Cin_p, W)

    # weights: wt[o, (dy*3+dx)*Cin_p + c] = weight[o, c, dy, dx]
    wt = jnp.transpose(weight, (0, 2, 3, 1))                 # (Cout, 3, 3, Cin)
    if Cin_p != Cin:
        wt = jnp.pad(wt, ((0, 0), (0, 0), (0, 0), (0, Cin_p - Cin)))
    wt = wt.reshape(Cout, 9 * Cin_p)
    if Cout_p != Cout:
        wt = jnp.pad(wt, ((0, Cout_p - Cout), (0, 0)))
    wt = wt.astype(cdt)
    b2 = bias if Cout_p == Cout else jnp.pad(bias, (0, Cout_p - Cout))
    b2 = b2.reshape(Cout_p, 1).astype(jnp.float32)

    kernel = functools.partial(_conv3x3_lrelu_kernel, W=W,
                               roll_sign=_pltpu_roll_sign())

    out_flat = pl.pallas_call(
        kernel,
        out_shape=jax.ShapeDtypeStruct((N, Cout_p, H * W), out_dtype),
        grid=(N, nh),
        in_specs=[
            pl.BlockSpec((1, Cin_p, THW), lambda n, h: (n, 0, h)),
            pl.BlockSpec((1, 6, Cin_p, W), lambda n, h: (n * nh + h, 0, 0, 0)),
            pl.BlockSpec((Cout_p, 9 * Cin_p), lambda n, h: (0, 0)),
            pl.BlockSpec((Cout_p, 1), lambda n, h: (0, 0)),
        ],
        out_specs=pl.BlockSpec((1, Cout_p, THW), lambda n, h: (n, 0, h)),
        scratch_shapes=[pltpu.VMEM((9 * Cin_p, THW), cdt)],
        compiler_params=pltpu.CompilerParams(
            dimension_semantics=("parallel", "parallel"),
            vmem_limit_bytes=vmem_limit),
    )(x_flat, halo, wt, b2)

    out = out_flat.reshape(N, Cout_p, H, W)                  # free (row-major)
    if Cout_p != Cout:
        out = out[:, :Cout]
    return out


def single_conv(x_nchw, params):
    """Forward of the PyTorch single_conv module (NCHW in, NCHW out)."""
    return conv3x3_lrelu(x_nchw, params['w'], params['b'])


# ----------------------------------------------------------------------------
# Deterministic synthetic parameters (PyTorch-like Conv2d init)
# ----------------------------------------------------------------------------
def init_single_conv_params(key, in_ch, out_ch):
    kw, kb = jax.random.split(key)
    bound = 1.0 / jnp.sqrt(jnp.float32(in_ch * 9))
    w = jax.random.uniform(kw, (out_ch, in_ch, 3, 3), jnp.float32, -bound, bound)
    b = jax.random.uniform(kb, (out_ch,), jnp.float32, -bound, bound)
    return {'w': w, 'b': b}


if __name__ == "__main__":
    _pltpu_roll_sign()                       # prime the cached roll-convention probe

    key = jax.random.PRNGKey(0)
    k_param, k_x = jax.random.split(key)

    N, in_ch, out_ch, H, W = 2, 4, 32, 16, 16
    params = init_single_conv_params(k_param, in_ch, out_ch)
    x = jax.random.normal(k_x, (N, in_ch, H, W), jnp.float32)   # NCHW, like PyTorch

    # pure-JAX reference (== PyTorch Conv2d(3x3, pad=1) + LeakyReLU(0.2))
    ref = jax.lax.conv_general_dilated(
        x, params['w'], window_strides=(1, 1), padding=((1, 1), (1, 1)),
        dimension_numbers=('NCHW', 'OIHW', 'NCHW'),
        precision=jax.lax.Precision.HIGHEST)
    ref = ref + params['b'][None, :, None, None]
    ref = jnp.where(ref > 0, ref, NEG_SLOPE * ref)

    # f32-operand check with an explicit 2-tile grid -> exercises the halo path
    fwd_f32 = jax.jit(functools.partial(conv3x3_lrelu, compute_dtype=jnp.float32,
                                        row_tile=8))
    out_f32 = jax.block_until_ready(fwd_f32(x, params['w'], params['b']))
    assert out_f32.shape == (N, out_ch, H, W), out_f32.shape
    err_f32 = float(jnp.max(jnp.abs(out_f32 - ref)))
    assert err_f32 < 2e-2, f"f32 path max err {err_f32}"

    # default production path (bf16 MXU operands; accepted approximation)
    fwd = jax.jit(single_conv)
    out = jax.block_until_ready(fwd(x, params))
    assert out.shape == (N, out_ch, H, W), out.shape
    assert bool(jnp.all(jnp.isfinite(out)))
    err_bf16 = float(jnp.max(jnp.abs(out - ref)))
    assert err_bf16 < 5e-2, f"bf16 path max err {err_bf16}"

    print("KERNEL_OK")
</pallas_src>

<mosaic_0001>
module attributes {stable_mosaic.version = 11 : i64} {
  func.func @k(%arg0: memref<8x128xi32, #tpu.memory_space<vmem>>, %arg1: memref<8x128xi32, #tpu.memory_space<vmem>>) attributes {dimension_semantics = [], scalar_prefetch = 0 : i64, scratch_operands = 0 : i64, tpu.core_type = #tpu.core_type<tc>} {
    %c0 = arith.constant 0 : index
    %c0_0 = arith.constant 0 : index
    %0 = vector.load %arg0[%c0, %c0_0] : memref<8x128xi32, #tpu.memory_space<vmem>>, vector<8x128xi32>
    %c1_i32 = arith.constant 1 : i32
    %1 = tpu.dynamic_rotate %0 by %c1_i32 dim 1 : vector<8x128xi32>, i32 -> vector<8x128xi32>
    %c0_1 = arith.constant 0 : index
    %c0_2 = arith.constant 0 : index
    %2 = vector.load %arg1[%c0_1, %c0_2] : memref<8x128xi32, #tpu.memory_space<vmem>>, vector<8x128xi32>
    tpu.vector_store %arg1[%c0_1, %c0_2], %1 {strides = array<i32>} : memref<8x128xi32, #tpu.memory_space<vmem>>, vector<8x128xi32>,
    return
  }
}

</mosaic_0001>

<llo_original>
// kernel: tpu_custom_call.1
$region0: #{tpu_custom_call.1}
  #allocation0 [shape = 'u32[]', space=smem, size = 0x4, offset = 0x4, fixed_abs, tag = 'smem constant byte address 0x4 - core index']
  #allocation1 [shape = 'u32[72,128]{1,0:T(1,128)}', space=vmem, size = 0x9000, scoped, tag = 'internal scratch']
  %s0 = inlined_call_operand.hbm [shape: s32[8,128], index: 0, kind: input, shape index: {}]
  %s1 = inlined_call_operand.hbm [shape: s32[8,128], index: 1, kind: output, shape index: {}]
  %s2 = sld [smem:[#allocation0]]
  $region18: #{tpu_custom_call.1} parent=0
    _
  %s4 = ssub.s32 1, %s2
  %s5 = scalar_select 0, %s4, %s2
  $region1: #{tpu_custom_call.1} parent=0
    #allocation2 [shape = 'u8[4096]{0}', space=vmem, size = 0x1000, scoped, tag = 'input window, operand 0, single buffered']
    #allocation3 [shape = 's32[1]{0}', space=sflag, size = 0x4, scoped, tag = 'scoped memory for tpu_custom_call.1']
    #allocation4 [shape = 's32[1]{0}', space=sflag, size = 0x4, scoped, tag = 'scoped memory for tpu_custom_call.1']
    #allocation5 [shape = 'u8[4096]{0}', space=vmem, size = 0x1000, scoped, tag = 'output window, operand 0, single buffered']
    %6 = vsyncpa [#allocation3], 0
    %7 = vsyncpa [#allocation4], 0
    // Predicated region
    $region2: #{tpu_custom_call.1} parent=1 // pred_check
      _
    $region3: #{tpu_custom_call.1} parent=1 // pred_check_branch
      %9 = sbr.rel (0) target = $region5
    $region4: #{tpu_custom_call.1} parent=1 // pred_region
      %11 = vsyncadd [#allocation3], 0
      %s13 = sshll.u32 %s0, 4
      %s14 = int_to_ptr.hbm [resolvable:$true] %s13
      %s15 = sshll.u32 [#allocation2], 4
      %s16 = int_to_ptr.vmem [resolvable:$true] %s15
      %18 = dma.hbm_to_vmem [thread:$0]  %s14, 128, %s16, [#allocation3]
    $region5: #{tpu_custom_call.1} parent=1 // pred_fallthru
      _
    // Predicated region
    $region6: #{tpu_custom_call.1} parent=1 // pred_check
      _
    $region7: #{tpu_custom_call.1} parent=1 // pred_check_branch
      %20 = sbr.rel (0) target = $region9
    $region8: #{tpu_custom_call.1} parent=1 // pred_region
      %22 = dma.done [#allocation3], 128
    $region9: #{tpu_custom_call.1} parent=1 // pred_fallthru
      _
    %v23 = vld [vmem:[#allocation2] sm:$0xff]
    %24 = vrot.lane.b32.xlu0 %v23, 1
    %v25 = vpop.permute.xlu0 %24
    %26 = vst [vmem:[#allocation5] sm:$0xff] %v25
    // Predicated region
    $region10: #{tpu_custom_call.1} parent=1 // pred_check
      _
    $region11: #{tpu_custom_call.1} parent=1 // pred_check_branch
      %28 = sbr.rel (0) target = $region13
    $region12: #{tpu_custom_call.1} parent=1 // pred_region
      %30 = vsyncadd [#allocation4], 0
      %s32 = sshll.u32 [#allocation5], 4
      %s33 = int_to_ptr.vmem [resolvable:$true] %s32
      %s34 = sshll.u32 %s1, 4
      %s35 = int_to_ptr.hbm [resolvable:$true] %s34
      %37 = dma.vmem_to_hbm [thread:$0]  %s33, 128, %s35, [#allocation4]
    $region13: #{tpu_custom_call.1} parent=1 // pred_fallthru
      _
    // Predicated region
    $region14: #{tpu_custom_call.1} parent=1 // pred_check
      _
    $region15: #{tpu_custom_call.1} parent=1 // pred_check_branch
      %39 = sbr.rel (0) target = $region17
    $region16: #{tpu_custom_call.1} parent=1 // pred_region
      %41 = dma.done [#allocation4], 128
    $region17: #{tpu_custom_call.1} parent=1 // pred_fallthru
      _
    %42 = vsyncpa [#allocation3], 1
    %43 = vsyncpa [#allocation4], 1

</llo_original>
